<compile_context>
chip_gen: v5e
topology: v5e:2x2
jax: 0.10.0
libtpu: 0.0.40
codegen_flags: <defaults>
</compile_context>

<pallas_src>
import math
import functools

import jax
import jax.numpy as jnp
from jax.experimental import pallas as pl
from jax.experimental.pallas import tpu as pltpu


def _ceil_to(x, m):
    return -(-x // m) * m


# ------------------------- fused Pallas kernel (whole TemporalCnn stack) -------------------------

def _tcn_stack_kernel(x_ref, w_ref, b_ref, o_ref, buf0, buf1, *,
                      dilations, kernel_size, seq_len, pad_cols):
    """Fused forward of all TemporalCnn layers for one batch element.

    x_ref : (1, C, L) f32              input block
    w_ref : (num_levels*K, C, C) bf16  per-layer, per-tap conv weights (tap j of layer l = row l*K+j)
    b_ref : (num_levels, C, 1) f32     per-layer bias
    o_ref : (1, C, L)                  output block
    buf0/buf1 : (C, pad_cols + L) bf16 ping-pong resident activations (causal left pad kept zero)
    """
    K = kernel_size
    L = seq_len
    nl = len(dilations)
    C = x_ref.shape[1]

    # Re-zero ONLY the causal-pad columns (scratch persists across grid steps, so this must run
    # every step); the [pad_cols:] slab is fully overwritten below, so no other zero-fill needed.
    pad_zeros = jnp.zeros((C, pad_cols), buf0.dtype)
    buf0[:, :pad_cols] = pad_zeros
    buf1[:, :pad_cols] = pad_zeros
    buf0[:, pad_cols:] = x_ref[0].astype(buf0.dtype)

    bufs = (buf0, buf1)
    for l, d in enumerate(dilations):              # static, unrolled layer loop
        src = bufs[l % 2]
        dst = bufs[(l + 1) % 2]
        base = pad_cols - (K - 1) * d              # layer-local padded-input start in shared slab

        # Causal dilated conv == K accumulated MXU matmuls over shifted resident views.
        # bf16 operands, f32 accumulation; no materialized (K*C, L) concatenate.
        acc = jnp.dot(w_ref[l * K], src[:, base:base + L],
                      preferred_element_type=jnp.float32)
        for j in range(1, K):
            acc += jnp.dot(w_ref[l * K + j],
                           src[:, base + j * d: base + j * d + L],
                           preferred_element_type=jnp.float32)
        acc += b_ref[l]                            # (C, 1) f32 bias, broadcast over L

        # nn.LeakyReLU(True) -> negative_slope == 1.0 -> identity (elided).
        # nn.Dropout -> identity in eval mode.
        if l + 1 < nl:
            dst[:, pad_cols:] = acc.astype(dst.dtype)
        else:
            # Last layer: skip the bf16 round trip; write the f32 result straight out.
            o_ref[0] = acc.astype(o_ref.dtype)


def tcn_global_forward(x, w_stacked, b_stacked, dilations, kernel_size):
    """x: (B, C, L) f32; w_stacked: (num_levels, K, C_out, C_in) f32; b_stacked: (num_levels, C, 1)."""
    B, C, L = x.shape
    num_levels = w_stacked.shape[0]
    K = kernel_size
    max_pad = (K - 1) * max(dilations)
    # Lane-align the live activation slab: round the causal-pad region up to 128 lanes so every
    # per-layer [:, pad_cols:] store starts on a vreg lane boundary (unmasked stores).
    pad_cols = _ceil_to(max(max_pad, 1), 128)

    # bf16 MXU operands; flatten host-side to (num_levels*K, C_out, C_in), tap j of layer l at
    # row l*K + j. Bias stays f32 (added to the f32 accumulator).
    w_flat = w_stacked.reshape(num_levels * K, C, C).astype(jnp.bfloat16)
    b_f32 = b_stacked.astype(jnp.float32)

    kernel = functools.partial(
        _tcn_stack_kernel, dilations=tuple(dilations), kernel_size=K,
        seq_len=L, pad_cols=pad_cols)

    # VMEM budget from the actual (lane/sublane-padded) footprint, not a hardcoded cap.
    def _tile_bytes(rows, cols, itemsize, sublane):
        return _ceil_to(max(rows, 1), sublane) * _ceil_to(max(cols, 1), 128) * itemsize

    scratch_bytes = 2 * _tile_bytes(C, pad_cols + L, 2, 16)          # bf16 ping-pong slabs
    io_bytes = 2 * 2 * _tile_bytes(C, L, 4, 8)                        # double-buffered x + o blocks
    w_bytes = 2 * num_levels * K * _tile_bytes(C, C, 2, 16)           # (grid-invariant) weights
    bias_bytes = 2 * num_levels * _tile_bytes(C, 1, 4, 8)
    footprint = scratch_bytes + io_bytes + w_bytes + bias_bytes
    vmem_limit = int(min(64 * 2 ** 20, max(2 * footprint, 4 * 2 ** 20)))

    # TODO(synk): at realistic L, add an "arbitrary" L-tile grid axis with a per-layer
    # (C, (K-1)*d_l) causal carry kept in scratch so residency stays bounded on v7x's 64 MiB VMEM,
    # and make the L tile a multiple of 128 (256 on v6e/v7x) so the matmul N reaches MXU width.
    return pl.pallas_call(
        kernel,
        out_shape=jax.ShapeDtypeStruct((B, C, L), x.dtype),
        grid_spec=pltpu.PrefetchScalarGridSpec(
            num_scalar_prefetch=0,
            grid=(B,),                                   # B=2 -> even 2-way megacore split on v7x
            in_specs=[
                pl.BlockSpec((1, C, L), lambda b: (b, 0, 0)),
                pl.BlockSpec((num_levels * K, C, C), lambda b: (0, 0, 0)),
                pl.BlockSpec((num_levels, C, 1), lambda b: (0, 0, 0)),
            ],
            out_specs=pl.BlockSpec((1, C, L), lambda b: (b, 0, 0)),
            scratch_shapes=[
                pltpu.VMEM((C, pad_cols + L), jnp.bfloat16),
                pltpu.VMEM((C, pad_cols + L), jnp.bfloat16),
            ],
        ),
        compiler_params=pltpu.CompilerParams(
            dimension_semantics=("parallel",),           # batch shards across TCs on v7x
            vmem_limit_bytes=vmem_limit,
        ),
    )(x, w_flat, b_f32)


# ------------------------- Tcn_Global parameter init (weight_norm folded) -------------------------

def init_tcn_global(key, num_inputs, num_outputs, kernel_size=3):
    num_levels = math.ceil(math.log2((num_inputs - 1) * (2 - 1) / (kernel_size - 1) + 1))
    ws, bs, dils = [], [], []
    for i in range(num_levels):
        key, kw, kb = jax.random.split(key, 3)
        # conv.weight ~ N(0, 0.001); weight_norm with g == ||v|| (init-time identity) is folded.
        w = jax.random.normal(kw, (num_outputs, num_outputs, kernel_size), jnp.float32) * 0.001
        bound = 1.0 / math.sqrt(num_outputs * kernel_size)
        b = jax.random.uniform(kb, (num_outputs,), jnp.float32, minval=-bound, maxval=bound)
        # Tap-major layout (K, C_out, C_in): w_t[j, o, c] == w[o, c, j].
        ws.append(jnp.transpose(w, (2, 0, 1)))
        bs.append(b.reshape(num_outputs, 1))
        dils.append(2 ** i)
    return jnp.stack(ws), jnp.stack(bs), tuple(dils)


# ------------------------- pure-JAX reference (for verification) -------------------------

def tcn_global_ref(x, w_stacked, b_stacked, dilations, kernel_size):
    B, C, L = x.shape
    K = kernel_size
    for l, d in enumerate(dilations):
        pad = (K - 1) * d
        x_pad = jnp.pad(x, ((0, 0), (0, 0), (pad, 0)))
        acc = jnp.zeros((B, C, L), jnp.float32)
        for j in range(K):
            xs = x_pad[:, :, j * d: j * d + L]
            acc = acc + jnp.einsum("oc,bcl->bol", w_stacked[l, j], xs)
        x = acc + b_stacked[l][None]               # LeakyReLU(slope=1.0) == identity
    return x


# ------------------------- main -------------------------

if __name__ == "__main__":
    key = jax.random.PRNGKey(0)
    num_inputs = 16      # -> num_levels = ceil(log2((16-1)/2 + 1)) = 4, dilations 1, 2, 4, 8
    num_outputs = 8      # channel count (each layer is num_outputs -> num_outputs)
    kernel_size = 3
    B, L = 2, 16

    kx, kp = jax.random.split(key)
    x = jax.random.normal(kx, (B, num_outputs, L), jnp.float32)
    w_stacked, b_stacked, dilations = init_tcn_global(kp, num_inputs, num_outputs, kernel_size)

    out = tcn_global_forward(x, w_stacked, b_stacked, dilations, kernel_size)
    out = jax.block_until_ready(out)

    ref = tcn_global_ref(x, w_stacked, b_stacked, dilations, kernel_size)
    assert out.shape == (B, num_outputs, L), out.shape
    # bf16 MXU operands / resident activations (f32 accumulation, f32 final write): compare at a
    # bf16-appropriate tolerance against the f32 reference.
    assert jnp.allclose(out, ref, atol=1e-3, rtol=1e-2), "mismatch vs reference"

    print("KERNEL_OK")
</pallas_src>

<mosaic_0001>
module attributes {stable_mosaic.version = 11 : i64} {
  func.func @_tcn_stack_kernel(%arg0: i32, %arg1: memref<1x8x16xf32, #tpu.memory_space<vmem>>, %arg2: memref<12x8x8xbf16, #tpu.memory_space<vmem>>, %arg3: memref<4x8x1xf32, #tpu.memory_space<vmem>>, %arg4: memref<1x8x16xf32, #tpu.memory_space<vmem>>, %arg5: memref<8x144xbf16, #tpu.memory_space<vmem>>, %arg6: memref<8x144xbf16, #tpu.memory_space<vmem>>) attributes {dimension_semantics = [#tpu.dimension_semantics<parallel>], iteration_bounds = array<i64: 2>, scalar_prefetch = 0 : i64, scratch_operands = 2 : i64, tpu.core_type = #tpu.core_type<tc>, window_params = [{transform_indices = @transform_0, window_bounds = array<i64: 1, 8, 16>}, {pipeline_mode = #tpu.pipeline_mode<synchronous>, transform_indices = @transform_1, window_bounds = array<i64: 12, 8, 8>}, {pipeline_mode = #tpu.pipeline_mode<synchronous>, transform_indices = @transform_2, window_bounds = array<i64: 4, 8, 1>}, {transform_indices = @transform_3, window_bounds = array<i64: 1, 8, 16>}]} {
    %cst = arith.constant 0.000000e+00 : bf16
    %0 = vector.broadcast %cst : bf16 to vector<8x128xbf16>
    %c0 = arith.constant 0 : index
    %c0_0 = arith.constant 0 : index
    %1 = vector.load %arg5[%c0, %c0_0] : memref<8x144xbf16, #tpu.memory_space<vmem>>, vector<8x128xbf16>
    tpu.vector_store %arg5[%c0, %c0_0], %0 {strides = array<i32>} : memref<8x144xbf16, #tpu.memory_space<vmem>>, vector<8x128xbf16>,
    %c0_1 = arith.constant 0 : index
    %c0_2 = arith.constant 0 : index
    %2 = vector.load %arg6[%c0_1, %c0_2] : memref<8x144xbf16, #tpu.memory_space<vmem>>, vector<8x128xbf16>
    tpu.vector_store %arg6[%c0_1, %c0_2], %0 {strides = array<i32>} : memref<8x144xbf16, #tpu.memory_space<vmem>>, vector<8x128xbf16>,
    %c0_3 = arith.constant 0 : index
    %c0_4 = arith.constant 0 : index
    %c0_5 = arith.constant 0 : index
    %3 = vector.load %arg1[%c0_3, %c0_4, %c0_5] : memref<1x8x16xf32, #tpu.memory_space<vmem>>, vector<1x8x16xf32>
    %4 = vector.shape_cast %3 : vector<1x8x16xf32> to vector<8x16xf32>
    %5 = arith.truncf %4 : vector<8x16xf32> to vector<8x16xbf16>
    %c0_6 = arith.constant 0 : index
    %c128 = arith.constant 128 : index
    %6 = vector.load %arg5[%c0_6, %c128] : memref<8x144xbf16, #tpu.memory_space<vmem>>, vector<8x16xbf16>
    tpu.vector_store %arg5[%c0_6, %c128], %5 {strides = array<i32>} : memref<8x144xbf16, #tpu.memory_space<vmem>>, vector<8x16xbf16>,
    %c0_7 = arith.constant 0 : index
    %c0_8 = arith.constant 0 : index
    %c0_9 = arith.constant 0 : index
    %7 = vector.load %arg2[%c0_7, %c0_8, %c0_9] : memref<12x8x8xbf16, #tpu.memory_space<vmem>>, vector<1x8x8xbf16>
    %8 = vector.shape_cast %7 : vector<1x8x8xbf16> to vector<8x8xbf16>
    %c0_10 = arith.constant 0 : index
    %c126 = arith.constant 126 : index
    %9 = vector.load %arg5[%c0_10, %c126] : memref<8x144xbf16, #tpu.memory_space<vmem>>, vector<8x16xbf16>
    %cst_11 = arith.constant dense<0.000000e+00> : vector<8x16xf32>
    %10 = tpu.matmul %8, %9, %cst_11 {dimension_numbers = #tpu.dot_dimension_numbers<[1], [0], [0], [1], [0, 0, 1, 1], [], []>} : vector<8x8xbf16>, vector<8x16xbf16>, vector<8x16xf32> -> vector<8x16xf32>
    %c1 = arith.constant 1 : index
    %c0_12 = arith.constant 0 : index
    %c0_13 = arith.constant 0 : index
    %11 = vector.load %arg2[%c1, %c0_12, %c0_13] : memref<12x8x8xbf16, #tpu.memory_space<vmem>>, vector<1x8x8xbf16>
    %12 = vector.shape_cast %11 : vector<1x8x8xbf16> to vector<8x8xbf16>
    %c0_14 = arith.constant 0 : index
    %c127 = arith.constant 127 : index
    %13 = vector.load %arg5[%c0_14, %c127] : memref<8x144xbf16, #tpu.memory_space<vmem>>, vector<8x16xbf16>
    %cst_15 = arith.constant dense<0.000000e+00> : vector<8x16xf32>
    %14 = tpu.matmul %12, %13, %cst_15 {dimension_numbers = #tpu.dot_dimension_numbers<[1], [0], [0], [1], [0, 0, 1, 1], [], []>} : vector<8x8xbf16>, vector<8x16xbf16>, vector<8x16xf32> -> vector<8x16xf32>
    %15 = arith.addf %10, %14 : vector<8x16xf32>
    %c2 = arith.constant 2 : index
    %c0_16 = arith.constant 0 : index
    %c0_17 = arith.constant 0 : index
    %16 = vector.load %arg2[%c2, %c0_16, %c0_17] : memref<12x8x8xbf16, #tpu.memory_space<vmem>>, vector<1x8x8xbf16>
    %17 = vector.shape_cast %16 : vector<1x8x8xbf16> to vector<8x8xbf16>
    %c0_18 = arith.constant 0 : index
    %c128_19 = arith.constant 128 : index
    %18 = vector.load %arg5[%c0_18, %c128_19] : memref<8x144xbf16, #tpu.memory_space<vmem>>, vector<8x16xbf16>
    %cst_20 = arith.constant dense<0.000000e+00> : vector<8x16xf32>
    %19 = tpu.matmul %17, %18, %cst_20 {dimension_numbers = #tpu.dot_dimension_numbers<[1], [0], [0], [1], [0, 0, 1, 1], [], []>} : vector<8x8xbf16>, vector<8x16xbf16>, vector<8x16xf32> -> vector<8x16xf32>
    %20 = arith.addf %15, %19 : vector<8x16xf32>
    %c0_21 = arith.constant 0 : index
    %c0_22 = arith.constant 0 : index
    %c0_23 = arith.constant 0 : index
    %21 = vector.load %arg3[%c0_21, %c0_22, %c0_23] : memref<4x8x1xf32, #tpu.memory_space<vmem>>, vector<1x8x1xf32>
    %22 = vector.shape_cast %21 : vector<1x8x1xf32> to vector<8x1xf32>
    %23 = vector.broadcast %22 : vector<8x1xf32> to vector<8x16xf32>
    %24 = arith.addf %20, %23 : vector<8x16xf32>
    %25 = arith.truncf %24 : vector<8x16xf32> to vector<8x16xbf16>
    %c0_24 = arith.constant 0 : index
    %c128_25 = arith.constant 128 : index
    %26 = vector.load %arg6[%c0_24, %c128_25] : memref<8x144xbf16, #tpu.memory_space<vmem>>, vector<8x16xbf16>
    tpu.vector_store %arg6[%c0_24, %c128_25], %25 {strides = array<i32>} : memref<8x144xbf16, #tpu.memory_space<vmem>>, vector<8x16xbf16>,
    %c3 = arith.constant 3 : index
    %c0_26 = arith.constant 0 : index
    %c0_27 = arith.constant 0 : index
    %27 = vector.load %arg2[%c3, %c0_26, %c0_27] : memref<12x8x8xbf16, #tpu.memory_space<vmem>>, vector<1x8x8xbf16>
    %28 = vector.shape_cast %27 : vector<1x8x8xbf16> to vector<8x8xbf16>
    %c0_28 = arith.constant 0 : index
    %c124 = arith.constant 124 : index
    %29 = vector.load %arg6[%c0_28, %c124] : memref<8x144xbf16, #tpu.memory_space<vmem>>, vector<8x16xbf16>
    %cst_29 = arith.constant dense<0.000000e+00> : vector<8x16xf32>
    %30 = tpu.matmul %28, %29, %cst_29 {dimension_numbers = #tpu.dot_dimension_numbers<[1], [0], [0], [1], [0, 0, 1, 1], [], []>} : vector<8x8xbf16>, vector<8x16xbf16>, vector<8x16xf32> -> vector<8x16xf32>
    %c4 = arith.constant 4 : index
    %c0_30 = arith.constant 0 : index
    %c0_31 = arith.constant 0 : index
    %31 = vector.load %arg2[%c4, %c0_30, %c0_31] : memref<12x8x8xbf16, #tpu.memory_space<vmem>>, vector<1x8x8xbf16>
    %32 = vector.shape_cast %31 : vector<1x8x8xbf16> to vector<8x8xbf16>
    %c0_32 = arith.constant 0 : index
    %c126_33 = arith.constant 126 : index
    %33 = vector.load %arg6[%c0_32, %c126_33] : memref<8x144xbf16, #tpu.memory_space<vmem>>, vector<8x16xbf16>
    %cst_34 = arith.constant dense<0.000000e+00> : vector<8x16xf32>
    %34 = tpu.matmul %32, %33, %cst_34 {dimension_numbers = #tpu.dot_dimension_numbers<[1], [0], [0], [1], [0, 0, 1, 1], [], []>} : vector<8x8xbf16>, vector<8x16xbf16>, vector<8x16xf32> -> vector<8x16xf32>
    %35 = arith.addf %30, %34 : vector<8x16xf32>
    %c5 = arith.constant 5 : index
    %c0_35 = arith.constant 0 : index
    %c0_36 = arith.constant 0 : index
    %36 = vector.load %arg2[%c5, %c0_35, %c0_36] : memref<12x8x8xbf16, #tpu.memory_space<vmem>>, vector<1x8x8xbf16>
    %37 = vector.shape_cast %36 : vector<1x8x8xbf16> to vector<8x8xbf16>
    %c0_37 = arith.constant 0 : index
    %c128_38 = arith.constant 128 : index
    %38 = vector.load %arg6[%c0_37, %c128_38] : memref<8x144xbf16, #tpu.memory_space<vmem>>, vector<8x16xbf16>
    %cst_39 = arith.constant dense<0.000000e+00> : vector<8x16xf32>
    %39 = tpu.matmul %37, %38, %cst_39 {dimension_numbers = #tpu.dot_dimension_numbers<[1], [0], [0], [1], [0, 0, 1, 1], [], []>} : vector<8x8xbf16>, vector<8x16xbf16>, vector<8x16xf32> -> vector<8x16xf32>
    %40 = arith.addf %35, %39 : vector<8x16xf32>
    %c1_40 = arith.constant 1 : index
    %c0_41 = arith.constant 0 : index
    %c0_42 = arith.constant 0 : index
    %41 = vector.load %arg3[%c1_40, %c0_41, %c0_42] : memref<4x8x1xf32, #tpu.memory_space<vmem>>, vector<1x8x1xf32>
    %42 = vector.shape_cast %41 : vector<1x8x1xf32> to vector<8x1xf32>
    %43 = vector.broadcast %42 : vector<8x1xf32> to vector<8x16xf32>
    %44 = arith.addf %40, %43 : vector<8x16xf32>
    %45 = arith.truncf %44 : vector<8x16xf32> to vector<8x16xbf16>
    %c0_43 = arith.constant 0 : index
    %c128_44 = arith.constant 128 : index
    %46 = vector.load %arg5[%c0_43, %c128_44] : memref<8x144xbf16, #tpu.memory_space<vmem>>, vector<8x16xbf16>
    tpu.vector_store %arg5[%c0_43, %c128_44], %45 {strides = array<i32>} : memref<8x144xbf16, #tpu.memory_space<vmem>>, vector<8x16xbf16>,
    %c6 = arith.constant 6 : index
    %c0_45 = arith.constant 0 : index
    %c0_46 = arith.constant 0 : index
    %47 = vector.load %arg2[%c6, %c0_45, %c0_46] : memref<12x8x8xbf16, #tpu.memory_space<vmem>>, vector<1x8x8xbf16>
    %48 = vector.shape_cast %47 : vector<1x8x8xbf16> to vector<8x8xbf16>
    %c0_47 = arith.constant 0 : index
    %c120 = arith.constant 120 : index
    %49 = vector.load %arg5[%c0_47, %c120] : memref<8x144xbf16, #tpu.memory_space<vmem>>, vector<8x16xbf16>
    %cst_48 = arith.constant dense<0.000000e+00> : vector<8x16xf32>
    %50 = tpu.matmul %48, %49, %cst_48 {dimension_numbers = #tpu.dot_dimension_numbers<[1], [0], [0], [1], [0, 0, 1, 1], [], []>} : vector<8x8xbf16>, vector<8x16xbf16>, vector<8x16xf32> -> vector<8x16xf32>
    %c7 = arith.constant 7 : index
    %c0_49 = arith.constant 0 : index
    %c0_50 = arith.constant 0 : index
    %51 = vector.load %arg2[%c7, %c0_49, %c0_50] : memref<12x8x8xbf16, #tpu.memory_space<vmem>>, vector<1x8x8xbf16>
    %52 = vector.shape_cast %51 : vector<1x8x8xbf16> to vector<8x8xbf16>
    %c0_51 = arith.constant 0 : index
    %c124_52 = arith.constant 124 : index
    %53 = vector.load %arg5[%c0_51, %c124_52] : memref<8x144xbf16, #tpu.memory_space<vmem>>, vector<8x16xbf16>
    %cst_53 = arith.constant dense<0.000000e+00> : vector<8x16xf32>
    %54 = tpu.matmul %52, %53, %cst_53 {dimension_numbers = #tpu.dot_dimension_numbers<[1], [0], [0], [1], [0, 0, 1, 1], [], []>} : vector<8x8xbf16>, vector<8x16xbf16>, vector<8x16xf32> -> vector<8x16xf32>
    %55 = arith.addf %50, %54 : vector<8x16xf32>
    %c8 = arith.constant 8 : index
    %c0_54 = arith.constant 0 : index
    %c0_55 = arith.constant 0 : index
    %56 = vector.load %arg2[%c8, %c0_54, %c0_55] : memref<12x8x8xbf16, #tpu.memory_space<vmem>>, vector<1x8x8xbf16>
    %57 = vector.shape_cast %56 : vector<1x8x8xbf16> to vector<8x8xbf16>
    %c0_56 = arith.constant 0 : index
    %c128_57 = arith.constant 128 : index
    %58 = vector.load %arg5[%c0_56, %c128_57] : memref<8x144xbf16, #tpu.memory_space<vmem>>, vector<8x16xbf16>
    %cst_58 = arith.constant dense<0.000000e+00> : vector<8x16xf32>
    %59 = tpu.matmul %57, %58, %cst_58 {dimension_numbers = #tpu.dot_dimension_numbers<[1], [0], [0], [1], [0, 0, 1, 1], [], []>} : vector<8x8xbf16>, vector<8x16xbf16>, vector<8x16xf32> -> vector<8x16xf32>
    %60 = arith.addf %55, %59 : vector<8x16xf32>
    %c2_59 = arith.constant 2 : index
    %c0_60 = arith.constant 0 : index
    %c0_61 = arith.constant 0 : index
    %61 = vector.load %arg3[%c2_59, %c0_60, %c0_61] : memref<4x8x1xf32, #tpu.memory_space<vmem>>, vector<1x8x1xf32>
    %62 = vector.shape_cast %61 : vector<1x8x1xf32> to vector<8x1xf32>
    %63 = vector.broadcast %62 : vector<8x1xf32> to vector<8x16xf32>
    %64 = arith.addf %60, %63 : vector<8x16xf32>
    %65 = arith.truncf %64 : vector<8x16xf32> to vector<8x16xbf16>
    %c0_62 = arith.constant 0 : index
    %c128_63 = arith.constant 128 : index
    %66 = vector.load %arg6[%c0_62, %c128_63] : memref<8x144xbf16, #tpu.memory_space<vmem>>, vector<8x16xbf16>
    tpu.vector_store %arg6[%c0_62, %c128_63], %65 {strides = array<i32>} : memref<8x144xbf16, #tpu.memory_space<vmem>>, vector<8x16xbf16>,
    %c9 = arith.constant 9 : index
    %c0_64 = arith.constant 0 : index
    %c0_65 = arith.constant 0 : index
    %67 = vector.load %arg2[%c9, %c0_64, %c0_65] : memref<12x8x8xbf16, #tpu.memory_space<vmem>>, vector<1x8x8xbf16>
    %68 = vector.shape_cast %67 : vector<1x8x8xbf16> to vector<8x8xbf16>
    %c0_66 = arith.constant 0 : index
    %c112 = arith.constant 112 : index
    %69 = vector.load %arg6[%c0_66, %c112] : memref<8x144xbf16, #tpu.memory_space<vmem>>, vector<8x16xbf16>
    %cst_67 = arith.constant dense<0.000000e+00> : vector<8x16xf32>
    %70 = tpu.matmul %68, %69, %cst_67 {dimension_numbers = #tpu.dot_dimension_numbers<[1], [0], [0], [1], [0, 0, 1, 1], [], []>} : vector<8x8xbf16>, vector<8x16xbf16>, vector<8x16xf32> -> vector<8x16xf32>
    %c10 = arith.constant 10 : index
    %c0_68 = arith.constant 0 : index
    %c0_69 = arith.constant 0 : index
    %71 = vector.load %arg2[%c10, %c0_68, %c0_69] : memref<12x8x8xbf16, #tpu.memory_space<vmem>>, vector<1x8x8xbf16>
    %72 = vector.shape_cast %71 : vector<1x8x8xbf16> to vector<8x8xbf16>
    %c0_70 = arith.constant 0 : index
    %c120_71 = arith.constant 120 : index
    %73 = vector.load %arg6[%c0_70, %c120_71] : memref<8x144xbf16, #tpu.memory_space<vmem>>, vector<8x16xbf16>
    %cst_72 = arith.constant dense<0.000000e+00> : vector<8x16xf32>
    %74 = tpu.matmul %72, %73, %cst_72 {dimension_numbers = #tpu.dot_dimension_numbers<[1], [0], [0], [1], [0, 0, 1, 1], [], []>} : vector<8x8xbf16>, vector<8x16xbf16>, vector<8x16xf32> -> vector<8x16xf32>
    %75 = arith.addf %70, %74 : vector<8x16xf32>
    %c11 = arith.constant 11 : index
    %c0_73 = arith.constant 0 : index
    %c0_74 = arith.constant 0 : index
    %76 = vector.load %arg2[%c11, %c0_73, %c0_74] : memref<12x8x8xbf16, #tpu.memory_space<vmem>>, vector<1x8x8xbf16>
    %77 = vector.shape_cast %76 : vector<1x8x8xbf16> to vector<8x8xbf16>
    %c0_75 = arith.constant 0 : index
    %c128_76 = arith.constant 128 : index
    %78 = vector.load %arg6[%c0_75, %c128_76] : memref<8x144xbf16, #tpu.memory_space<vmem>>, vector<8x16xbf16>
    %cst_77 = arith.constant dense<0.000000e+00> : vector<8x16xf32>
    %79 = tpu.matmul %77, %78, %cst_77 {dimension_numbers = #tpu.dot_dimension_numbers<[1], [0], [0], [1], [0, 0, 1, 1], [], []>} : vector<8x8xbf16>, vector<8x16xbf16>, vector<8x16xf32> -> vector<8x16xf32>
    %80 = arith.addf %75, %79 : vector<8x16xf32>
    %c3_78 = arith.constant 3 : index
    %c0_79 = arith.constant 0 : index
    %c0_80 = arith.constant 0 : index
    %81 = vector.load %arg3[%c3_78, %c0_79, %c0_80] : memref<4x8x1xf32, #tpu.memory_space<vmem>>, vector<1x8x1xf32>
    %82 = vector.shape_cast %81 : vector<1x8x1xf32> to vector<8x1xf32>
    %83 = vector.broadcast %82 : vector<8x1xf32> to vector<8x16xf32>
    %84 = arith.addf %80, %83 : vector<8x16xf32>
    %c0_81 = arith.constant 0 : index
    %c0_82 = arith.constant 0 : index
    %c0_83 = arith.constant 0 : index
    %85 = vector.load %arg4[%c0_81, %c0_82, %c0_83] : memref<1x8x16xf32, #tpu.memory_space<vmem>>, vector<1x8x16xf32>
    %86 = vector.shape_cast %85 : vector<1x8x16xf32> to vector<8x16xf32>
    %87 = vector.shape_cast %84 : vector<8x16xf32> to vector<1x8x16xf32>
    tpu.vector_store %arg4[%c0_81, %c0_82, %c0_83], %87 {strides = array<i32>} : memref<1x8x16xf32, #tpu.memory_space<vmem>>, vector<1x8x16xf32>,
    return
  }
  func.func @transform_0(%arg0: i32) -> (i32, i32, i32) {
    %c0_i32 = arith.constant 0 : i32
    %c0_i32_0 = arith.constant 0 : i32
    %c0_i32_1 = arith.constant 0 : i32
    return %arg0, %c0_i32, %c0_i32_0 : i32, i32, i32
  }
  func.func @transform_1(%arg0: i32) -> (i32, i32, i32) {
    %c0_i32 = arith.constant 0 : i32
    %c0_i32_0 = arith.constant 0 : i32
    %c0_i32_1 = arith.constant 0 : i32
    %c0_i32_2 = arith.constant 0 : i32
    return %c0_i32, %c0_i32_0, %c0_i32_1 : i32, i32, i32
  }
  func.func @transform_2(%arg0: i32) -> (i32, i32, i32) {
    %c0_i32 = arith.constant 0 : i32
    %c0_i32_0 = arith.constant 0 : i32
    %c0_i32_1 = arith.constant 0 : i32
    %c0_i32_2 = arith.constant 0 : i32
    return %c0_i32, %c0_i32_0, %c0_i32_1 : i32, i32, i32
  }
  func.func @transform_3(%arg0: i32) -> (i32, i32, i32) {
    %c0_i32 = arith.constant 0 : i32
    %c0_i32_0 = arith.constant 0 : i32
    %c0_i32_1 = arith.constant 0 : i32
    return %arg0, %c0_i32, %c0_i32_0 : i32, i32, i32
  }
}

</mosaic_0001>

<llo_original>
// kernel: tpu_custom_call.1
$region0: #{tpu_custom_call.1}
  #allocation0 [shape = 'u32[]', space=smem, size = 0x4, offset = 0x4, fixed_abs, tag = 'smem constant byte address 0x4 - core index']
  #allocation1 [shape = 'u32[72,128]{1,0:T(1,128)}', space=vmem, size = 0x9000, scoped, tag = 'internal scratch']
  #allocation2 [shape = 'bf16[8,144]{1,0:T(8,128)(2,1)}', space=vmem, size = 0x1000, scoped, tag = 'scratch operand']
  #allocation3 [shape = 'bf16[8,144]{1,0:T(8,128)(2,1)}', space=vmem, size = 0x1000, scoped, tag = 'scratch operand']
  %s0 = inlined_call_operand.vmem [shape: f32[2,8,16], index: 0, kind: input, shape index: {}]
  %s1 = inlined_call_operand.vmem [shape: bf16[12,8,8], index: 1, kind: input, shape index: {}]
  %s2 = inlined_call_operand.vmem [shape: f32[4,8,1], index: 2, kind: input, shape index: {}]
  %s3 = inlined_call_operand.hbm [shape: f32[2,8,16], index: 3, kind: output, shape index: {}]
  %s4 = sld [smem:[#allocation0]]
  $region45: #{tpu_custom_call.1} parent=0
    _
  %s6 = ssub.s32 1, %s4
  %s7 = scalar_select 0, %s6, %s4
  $region1: #{tpu_custom_call.1} parent=0
    #allocation4 [shape = 'u8[8192]{0}', space=vmem, size = 0x2000, scoped, tag = 'output window, operand 0']
    #allocation5 [shape = 's32[2]{0}', space=sflag, size = 0x8, scoped, tag = 'scoped memory for tpu_custom_call.1']
    %8 = vsyncpa [#allocation5], 0
    %s9 = scalar_lea.sflag [#allocation5], 1
    %10 = vsyncpa %s9, 0
    loop: start=0, step=1, limit=4
    $region2: #{tpu_custom_call.1} parent=1 // loop_pre_header
      _
    $region3: #{tpu_custom_call.1} parent=1 // loop_header
      %s12 = sphi 0, %s16
      %p13 = scmp.ge.s32.totalorder %s12, 4
      %s22 = sphi 0, %s24
      %s25 = sphi 0, %s22
      %s26 = sphi 0, %s25
      %s42 = sphi 0, %s26
      %s46 = sphi 0, %s46
      %s48 = sphi 0, %s46
      %s49 = sphi 0, %s48
      %s63 = sphi 0, %s49
      %s67 = sphi 0, %s67
      %s69 = sphi 0, %s67
      %s70 = sphi 0, %s69
      %s84 = sphi 0, %s70
      %s90 = sphi 0, %s92
      %s93 = sphi 0, %s90
      %s94 = sphi 0, %s93
      %s110 = sphi 0, %s94
    $region4: #{tpu_custom_call.1} parent=1 // loop_header_branch
      %15 = sbr.rel (%p13) target = $region8
    $region5: #{tpu_custom_call.1} parent=1 // loop_body
      %s17 = ssub.s32 %s12, 1
      %s18 = ssub.s32 %s12, 2
      %s19 = sadd.s32 %s12, 1
      %s20 = ssub.s32 %s12, %s19
      %p21 = scmp.eq.s32.totalorder %s20, 0
      %s23 = sadd.s32 %s22, 1
      %s24 = scalar_select %p21, %s22, %s23
      %p27 = pneg %p21
      %p28 = scmp.eq.s32.totalorder %s12, 1
      %p29 = por %p27, %p28
      %p30 = scmp.ne.s32.totalorder %s22, %s25
      %p31 = scmp.eq.s32.totalorder %s12, 0
      %p32 = por %p30, %p31
      %p33 = scmp.ne.s32.totalorder %s22, %s25
      %p34 = scmp.eq.s32.totalorder %s17, 1
      %p35 = por %p33, %p34
      %p36 = scmp.ne.s32.totalorder %s25, %s26
      %p37 = scmp.eq.s32.totalorder %s17, 0
      %p38 = por %p36, %p37
      %p39 = scmp.ne.s32.totalorder %s25, %s26
      %p40 = scmp.eq.s32.totalorder %s18, 1
      %p41 = por %p39, %p40
      %p43 = scmp.ne.s32.totalorder %s26, %s42
      %p44 = scmp.eq.s32.totalorder %s18, 0
      %p45 = por %p43, %p44
      %s47 = sadd.s32 %s46, 1
      %p50 = scmp.eq.s32.totalorder %s12, 1
      %p51 = scmp.ne.s32.totalorder %s46, %s48
      %p52 = scmp.eq.s32.totalorder %s12, 0
      %p53 = por %p51, %p52
      %p54 = scmp.ne.s32.totalorder %s46, %s48
      %p55 = scmp.eq.s32.totalorder %s17, 1
      %p56 = por %p54, %p55
      %p57 = scmp.ne.s32.totalorder %s48, %s49
      %p58 = scmp.eq.s32.totalorder %s17, 0
      %p59 = por %p57, %p58
      %p60 = scmp.ne.s32.totalorder %s48, %s49
      %p61 = scmp.eq.s32.totalorder %s18, 1
      %p62 = por %p60, %p61
      %p64 = scmp.ne.s32.totalorder %s49, %s63
      %p65 = scmp.eq.s32.totalorder %s18, 0
      %p66 = por %p64, %p65
      %s68 = sadd.s32 %s67, 1
      %p71 = scmp.eq.s32.totalorder %s12, 1
      %p72 = scmp.ne.s32.totalorder %s67, %s69
      %p73 = scmp.eq.s32.totalorder %s12, 0
      %p74 = por %p72, %p73
      %p75 = scmp.ne.s32.totalorder %s67, %s69
      %p76 = scmp.eq.s32.totalorder %s17, 1
      %p77 = por %p75, %p76
      %p78 = scmp.ne.s32.totalorder %s69, %s70
      %p79 = scmp.eq.s32.totalorder %s17, 0
      %p80 = por %p78, %p79
      %p81 = scmp.ne.s32.totalorder %s69, %s70
      %p82 = scmp.eq.s32.totalorder %s18, 1
      %p83 = por %p81, %p82
      %p85 = scmp.ne.s32.totalorder %s70, %s84
      %p86 = scmp.eq.s32.totalorder %s18, 0
      %p87 = por %p85, %p86
      %s88 = ssub.s32 %s12, %s19
      %p89 = scmp.eq.s32.totalorder %s88, 0
      %s91 = sadd.s32 %s90, 1
      %s92 = scalar_select %p89, %s90, %s91
      %p95 = pneg %p89
      %p96 = scmp.eq.s32.totalorder %s12, 1
      %p97 = por %p95, %p96
      %p98 = scmp.ne.s32.totalorder %s90, %s93
      %p99 = scmp.eq.s32.totalorder %s12, 0
      %p100 = por %p98, %p99
      %p101 = scmp.ne.s32.totalorder %s90, %s93
      %p102 = scmp.eq.s32.totalorder %s17, 1
      %p103 = por %p101, %p102
      %p104 = scmp.ne.s32.totalorder %s93, %s94
      %p105 = scmp.eq.s32.totalorder %s17, 0
      %p106 = por %p104, %p105
      %p107 = scmp.ne.s32.totalorder %s93, %s94
      %p108 = scmp.eq.s32.totalorder %s18, 1
      %p109 = por %p107, %p108
      %p111 = scmp.ne.s32.totalorder %s94, %s110
      %p112 = scmp.eq.s32.totalorder %s18, 0
      %p113 = por %p111, %p112
      %p114 = scmp.le.s32.totalorder 1, %s12
      %p115 = scmp.lt.s32.totalorder %s12, 3
      %p116 = pnand %p114, %p115
      %p117 = pneg %p116
      // Predicated region
      $region9: #{tpu_custom_call.1} parent=5 // pred_check
        _
      $region10: #{tpu_custom_call.1} parent=5 // pred_check_branch
        %119 = sbr.rel (%p116) target = $region12
      $region11: #{tpu_custom_call.1} parent=5 // pred_region
        %s120 = ssub.s32 %s12, 1
        // Predicated region
        $region13: #{tpu_custom_call.1} parent=11 // pred_check
          %p121 = pneg %p59
        $region14: #{tpu_custom_call.1} parent=11 // pred_check_branch
          %123 = sbr.rel (%p121) target = $region16
        $region15: #{tpu_custom_call.1} parent=11 // pred_region
          _
        $region16: #{tpu_custom_call.1} parent=11 // pred_fallthru
          _
        // Predicated region
        $region17: #{tpu_custom_call.1} parent=11 // pred_check
          %p124 = pneg %p80
        $region18: #{tpu_custom_call.1} parent=11 // pred_check_branch
          %126 = sbr.rel (%p124) target = $region20
        $region19: #{tpu_custom_call.1} parent=11 // pred_region
          _
        $region20: #{tpu_custom_call.1} parent=11 // pred_fallthru
          _
      $region12: #{tpu_custom_call.1} parent=5 // pred_fallthru
        _
      %p127 = scmp.lt.s32.totalorder %s12, 2
      // Predicated region
      $region21: #{tpu_custom_call.1} parent=5 // pred_check
        %p128 = pneg %p127
      $region22: #{tpu_custom_call.1} parent=5 // pred_check_branch
        %130 = sbr.rel (%p128) target = $region24
      $region23: #{tpu_custom_call.1} parent=5 // pred_region
        // Predicated region
        $region25: #{tpu_custom_call.1} parent=23 // pred_check
          %p131 = pneg %p32
        $region26: #{tpu_custom_call.1} parent=23 // pred_check_branch
          %133 = sbr.rel (%p131) target = $region28
        $region27: #{tpu_custom_call.1} parent=23 // pred_region
          %p134 = scmp.lt.s32.totalorder %s12, 1
          %s135 = scalar_select %p134, %s12, 1
          %s136 = smul.addr %s135, 8
          %s137 = scalar_lea.vmem %s0, %s136
        $region28: #{tpu_custom_call.1} parent=23 // pred_fallthru
          _
      $region24: #{tpu_custom_call.1} parent=5 // pred_fallthru
        _
      %p138 = scmp.le.s32.totalorder 1, %s12
      %p139 = scmp.lt.s32.totalorder %s12, 3
      %p140 = pnand %p138, %p139
      %p141 = pneg %p140
      // Predicated region
      $region29: #{tpu_custom_call.1} parent=5 // pred_check
        _
      $region30: #{tpu_custom_call.1} parent=5 // pred_check_branch
        %143 = sbr.rel (%p140) target = $region32
      $region31: #{tpu_custom_call.1} parent=5 // pred_region
        %s144 = ssub.s32 %s12, 1
        %p145 = scmp.lt.s32.totalorder %s17, 1
        %s146 = scalar_select %p145, %s17, 1
        %s147 = smul.addr %s146, 8
        %s148 = scalar_lea.vmem %s0, %s147
        %p149 = pneg %p38
        %p150 = pneg %p35
        %p151 = pneg %p59
        %p152 = pneg %p56
        %p153 = pneg %p80
        %p154 = pneg %p77
        %p155 = pneg %p106
        %p156 = pneg %p103
        %s157 = sand.u32 %s93, 1
        %s158 = scalar_lea.sflag [#allocation5], %s157
        %s159 = sand.u32 %s93, 1
        %s160 = smul.addr %s159, 8
        %s161 = scalar_lea.vmem [#allocation4], %s160
        %p162 = scmp.lt.s32.totalorder %s17, 1
        %s163 = scalar_select %p162, %s17, 1
        %s164 = smul.addr %s163, 8
        %s165 = scalar_lea.vmem %s0, %s164
        %167 = vst [vmem:[#allocation2] sm:$0xf] 0
        %168 = vst [vmem:[#allocation3] sm:$0xf] 0
        %v169 = vld [vmem:[%s165] sm:$0xff]
        %v170 = vpack.c.bf16 %v169, %v169
        %vm171 = vcmask 125952
        %172 = vst.msk [vmem:[#allocation2 + $0x4] sm:$0xf] %vm171, %v170
        %v173 = vld [vmem:[%s1] sm:$0xf]
        %v174 = vld [vmem:[#allocation2] sm:$0xff]
        %s175 = scalar_lea.vmem %s1, 4
        %v176 = vld [vmem:[%s175] sm:$0xf]
        %v178 = vunpack.c.l.b16 %v174
        %v179 = vunpack.c.h.b16 %v174
        %v180 = vpack.c.b16 %v178, %v178
        %v181 = vpack.c.b16 %v179, %v179
        %182 = vrot.lane.b32.xlu0 %v180, 1
        %v183 = vpop.permute.xlu0 %182
        %184 = vrot.lane.b32.xlu0 %v181, 1
        %v185 = vpop.permute.xlu0 %184
        %vm186 = vcmask 7168
        %v187 = vsel %vm186, %v183, %v185
        %vm188 = vcmask 64512
        %v190 = vsel %vm188, %v176, 0
        %vm192 = vcmask 1043456
        %v194 = vsel %vm192, %v187, 0
        %196 = vmatpush.bf16.msra.mxu0 0
        %197 = vmatpush.bf16.msra.mxu0 0
        %198 = vmatpush.bf16.msra.mxu0 0
        %199 = vmatpush.bf16.msra.mxu0 0
        %200 = vmatpush.bf16.msra.mxu0 0
        %201 = vmatpush.bf16.msra.mxu0 0
        %202 = vmatpush.bf16.msra.mxu0 0
        %203 = vmatpush.bf16.msra.mxu0 %v194
        %204 = vmatmul.bf16.gmra.mxu0 %v190
        %v205 = vpop.f32.mrf.mxu0
        %v206 = vadd.f32 0.0, %v205
        %v207 = vpop.f32.mrf.mxu0
        %208 = vdwg.mxu0
        %209 = vrot.lane.b32.xlu0 %v180, 2
        %v210 = vpop.permute.xlu0 %209
        %211 = vrot.lane.b32.xlu0 %v181, 2
        %v212 = vpop.permute.xlu0 %211
        %vm213 = vcmask 15360
        %v214 = vsel %vm213, %v210, %v212
        %v216 = vsel %vm188, %v173, 0
        %v219 = vsel %vm192, %v214, 0
        %221 = vmatpush.bf16.msra.mxu0 0
        %222 = vmatpush.bf16.msra.mxu0 0
        %223 = vmatpush.bf16.msra.mxu0 0
        %224 = vmatpush.bf16.msra.mxu0 0
        %225 = vmatpush.bf16.msra.mxu0 0
        %226 = vmatpush.bf16.msra.mxu0 0
        %227 = vmatpush.bf16.msra.mxu0 0
        %228 = vmatpush.bf16.msra.mxu0 %v219
        %229 = vmatmul.bf16.gmra.mxu0 %v216
        %v230 = vpop.f32.mrf.mxu0
        %v231 = vadd.f32 %v206, %v230
        %v232 = vpop.f32.mrf.mxu0
        %233 = vdwg.mxu0
        %s234 = scalar_lea.vmem %s1, 8
        %v235 = vld [vmem:[%s234] sm:$0xf]
        %v236 = vld [vmem:[#allocation2 + $0x4] sm:$0xf]
        %v238 = vsel %vm188, %v235, 0
        %v241 = vsel %vm192, %v236, 0
        %243 = vmatpush.bf16.msra.mxu0 0
        %244 = vmatpush.bf16.msra.mxu0 0
        %245 = vmatpush.bf16.msra.mxu0 0
        %246 = vmatpush.bf16.msra.mxu0 0
        %247 = vmatpush.bf16.msra.mxu0 0
        %248 = vmatpush.bf16.msra.mxu0 0
        %249 = vmatpush.bf16.msra.mxu0 0
        %250 = vmatpush.bf16.msra.mxu0 %v241
        %251 = vmatmul.bf16.gmra.mxu0 %v238
        %v252 = vpop.f32.mrf.mxu0
        %v253 = vadd.f32 0.0, %v252
        %v254 = vpop.f32.mrf.mxu0
        %255 = vdwg.mxu0
        %v256 = vadd.f32 %v231, %v253
        %v257 = vld [vmem:[%s2] sm:$0xff]
        %259 = vset.pattern.permute.xlu0 0
        %260 = vperm.xlu0 %259, %v257
        %v261 = vpop.permute.xlu0 %260
        %v263 = vadd.f32 %v256, %v261
        %v264 = vpack.c.bf16 %v263, %v263
        %265 = vst.msk [vmem:[#allocation3 + $0x4] sm:$0xf] %vm171, %v264
        %s266 = scalar_lea.vmem %s1, 12
        %v267 = vld [vmem:[%s266] sm:$0xf]
        %v268 = vld [vmem:[#allocation3] sm:$0xff]
        %s269 = scalar_lea.vmem %s1, 16
        %v270 = vld [vmem:[%s269] sm:$0xf]
        %v272 = vunpack.c.l.b16 %v268
        %v273 = vunpack.c.h.b16 %v268
        %v274 = vpack.c.b16 %v272, %v272
        %v275 = vpack.c.b16 %v273, %v273
        %276 = vrot.lane.b32.xlu0 %v274, 2
        %v277 = vpop.permute.xlu0 %276
        %278 = vrot.lane.b32.xlu0 %v275, 2
        %v279 = vpop.permute.xlu0 %278
        %v280 = vsel %vm213, %v277, %v279
        %v282 = vsel %vm188, %v270, 0
        %v285 = vsel %vm192, %v280, 0
        %287 = vmatpush.bf16.msra.mxu0 0
        %288 = vmatpush.bf16.msra.mxu0 0
        %289 = vmatpush.bf16.msra.mxu0 0
        %290 = vmatpush.bf16.msra.mxu0 0
        %291 = vmatpush.bf16.msra.mxu0 0
        %292 = vmatpush.bf16.msra.mxu0 0
        %293 = vmatpush.bf16.msra.mxu0 0
        %294 = vmatpush.bf16.msra.mxu0 %v285
        %295 = vmatmul.bf16.gmra.mxu0 %v282
        %v296 = vpop.f32.mrf.mxu0
        %v297 = vadd.f32 0.0, %v296
        %v298 = vpop.f32.mrf.mxu0
        %299 = vdwg.mxu0
        %300 = vrot.lane.b32.xlu0 %v274, 4
        %v301 = vpop.permute.xlu0 %300
        %302 = vrot.lane.b32.xlu0 %v275, 4
        %v303 = vpop.permute.xlu0 %302
        %vm304 = vcmask 31744
        %v305 = vsel %vm304, %v301, %v303
        %v307 = vsel %vm188, %v267, 0
        %v310 = vsel %vm192, %v305, 0
        %312 = vmatpush.bf16.msra.mxu0 0
        %313 = vmatpush.bf16.msra.mxu0 0
        %314 = vmatpush.bf16.msra.mxu0 0
        %315 = vmatpush.bf16.msra.mxu0 0
        %316 = vmatpush.bf16.msra.mxu0 0
        %317 = vmatpush.bf16.msra.mxu0 0
        %318 = vmatpush.bf16.msra.mxu0 0
        %319 = vmatpush.bf16.msra.mxu0 %v310
        %320 = vmatmul.bf16.gmra.mxu0 %v307
        %v321 = vpop.f32.mrf.mxu0
        %v322 = vadd.f32 %v297, %v321
        %v323 = vpop.f32.mrf.mxu0
        %324 = vdwg.mxu0
        %s325 = scalar_lea.vmem %s1, 20
        %v326 = vld [vmem:[%s325] sm:$0xf]
        %v327 = vld [vmem:[#allocation3 + $0x4] sm:$0xf]
        %v329 = vsel %vm188, %v326, 0
        %v332 = vsel %vm192, %v327, 0
        %334 = vmatpush.bf16.msra.mxu0 0
        %335 = vmatpush.bf16.msra.mxu0 0
        %336 = vmatpush.bf16.msra.mxu0 0
        %337 = vmatpush.bf16.msra.mxu0 0
        %338 = vmatpush.bf16.msra.mxu0 0
        %339 = vmatpush.bf16.msra.mxu0 0
        %340 = vmatpush.bf16.msra.mxu0 0
        %341 = vmatpush.bf16.msra.mxu0 %v332
        %342 = vmatmul.bf16.gmra.mxu0 %v329
        %v343 = vpop.f32.mrf.mxu0
        %v344 = vadd.f32 0.0, %v343
        %v345 = vpop.f32.mrf.mxu0
        %346 = vdwg.mxu0
        %v347 = vadd.f32 %v322, %v344
        %s348 = scalar_lea.vmem %s2, 8
        %v349 = vld [vmem:[%s348] sm:$0xff]
        %351 = vset.pattern.permute.xlu0 0
        %352 = vperm.xlu0 %351, %v349
        %v353 = vpop.permute.xlu0 %352
        %v355 = vadd.f32 %v347, %v353
        %v356 = vpack.c.bf16 %v355, %v355
        %357 = vst.msk [vmem:[#allocation2 + $0x4] sm:$0xf] %vm171, %v356
        %s358 = scalar_lea.vmem %s1, 24
        %v359 = vld [vmem:[%s358] sm:$0xf]
        %v360 = vld [vmem:[#allocation2] sm:$0xff]
        %s361 = scalar_lea.vmem %s1, 28
        %v362 = vld [vmem:[%s361] sm:$0xf]
        %v364 = vunpack.c.l.b16 %v360
        %v365 = vunpack.c.h.b16 %v360
        %v366 = vpack.c.b16 %v364, %v364
        %v367 = vpack.c.b16 %v365, %v365
        %368 = vrot.lane.b32.xlu0 %v366, 4
        %v369 = vpop.permute.xlu0 %368
        %370 = vrot.lane.b32.xlu0 %v367, 4
        %v371 = vpop.permute.xlu0 %370
        %v372 = vsel %vm304, %v369, %v371
        %v374 = vsel %vm188, %v362, 0
        %v377 = vsel %vm192, %v372, 0
        %379 = vmatpush.bf16.msra.mxu0 0
        %380 = vmatpush.bf16.msra.mxu0 0
        %381 = vmatpush.bf16.msra.mxu0 0
        %382 = vmatpush.bf16.msra.mxu0 0
        %383 = vmatpush.bf16.msra.mxu0 0
        %384 = vmatpush.bf16.msra.mxu0 0
        %385 = vmatpush.bf16.msra.mxu0 0
        %386 = vmatpush.bf16.msra.mxu0 %v377
        %387 = vmatmul.bf16.gmra.mxu0 %v374
        %v388 = vpop.f32.mrf.mxu0
        %v389 = vadd.f32 0.0, %v388
        %v390 = vpop.f32.mrf.mxu0
        %391 = vdwg.mxu0
        %392 = vrot.lane.b32.xlu0 %v366, 8
        %v393 = vpop.permute.xlu0 %392
        %394 = vrot.lane.b32.xlu0 %v367, 8
        %v395 = vpop.permute.xlu0 %394
        %vm396 = vcmask 64512
        %v397 = vsel %vm396, %v393, %v395
        %v399 = vsel %vm188, %v359, 0
        %v402 = vsel %vm192, %v397, 0
        %404 = vmatpush.bf16.msra.mxu0 0
        %405 = vmatpush.bf16.msra.mxu0 0
        %406 = vmatpush.bf16.msra.mxu0 0
        %407 = vmatpush.bf16.msra.mxu0 0
        %408 = vmatpush.bf16.msra.mxu0 0
        %409 = vmatpush.bf16.msra.mxu0 0
        %410 = vmatpush.bf16.msra.mxu0 0
        %411 = vmatpush.bf16.msra.mxu0 %v402
        %412 = vmatmul.bf16.gmra.mxu0 %v399
        %v413 = vpop.f32.mrf.mxu0
        %v414 = vadd.f32 %v389, %v413
        %v415 = vpop.f32.mrf.mxu0
        %416 = vdwg.mxu0
        %s417 = scalar_lea.vmem %s1, 32
        %v418 = vld [vmem:[%s417] sm:$0xf]
        %v419 = vld [vmem:[#allocation2 + $0x4] sm:$0xf]
        %v421 = vsel %vm188, %v418, 0
        %v424 = vsel %vm192, %v419, 0
        %426 = vmatpush.bf16.msra.mxu0 0
        %427 = vmatpush.bf16.msra.mxu0 0
        %428 = vmatpush.bf16.msra.mxu0 0
        %429 = vmatpush.bf16.msra.mxu0 0
        %430 = vmatpush.bf16.msra.mxu0 0
        %431 = vmatpush.bf16.msra.mxu0 0
        %432 = vmatpush.bf16.msra.mxu0 0
        %433 = vmatpush.bf16.msra.mxu0 %v424
        %434 = vmatmul.bf16.gmra.mxu0 %v421
        %v435 = vpop.f32.mrf.mxu0
        %v436 = vadd.f32 0.0, %v435
        %v437 = vpop.f32.mrf.mxu0
        %438 = vdwg.mxu0
        %v439 = vadd.f32 %v414, %v436
        %s440 = scalar_lea.vmem %s2, 16
        %v441 = vld [vmem:[%s440] sm:$0xff]
        %443 = vset.pattern.permute.xlu0 0
        %444 = vperm.xlu0 %443, %v441
        %v445 = vpop.permute.xlu0 %444
        %v447 = vadd.f32 %v439, %v445
        %v448 = vpack.c.bf16 %v447, %v447
        %449 = vst.msk [vmem:[#allocation3 + $0x4] sm:$0xf] %vm171, %v448
        %s450 = scalar_lea.vmem %s1, 36
        %v451 = vld [vmem:[%s450] sm:$0xf]
        %v452 = vld [vmem:[#allocation3] sm:$0xf]
        %s453 = scalar_lea.vmem %s1, 40
        %v454 = vld [vmem:[%s453] sm:$0xf]
        %v455 = vld [vmem:[#allocation3] sm:$0xff]
        %v457 = vunpack.c.l.b16 %v455
        %v458 = vunpack.c.h.b16 %v455
        %v459 = vpack.c.b16 %v457, %v457
        %v460 = vpack.c.b16 %v458, %v458
        %461 = vrot.lane.b32.xlu0 %v459, 8
        %v462 = vpop.permute.xlu0 %461
        %463 = vrot.lane.b32.xlu0 %v460, 8
        %v464 = vpop.permute.xlu0 %463
        %v465 = vsel %vm396, %v462, %v464
        %v467 = vsel %vm188, %v454, 0
        %v470 = vsel %vm192, %v465, 0
        %472 = vmatpush.bf16.msra.mxu0 0
        %473 = vmatpush.bf16.msra.mxu0 0
        %474 = vmatpush.bf16.msra.mxu0 0
        %475 = vmatpush.bf16.msra.mxu0 0
        %476 = vmatpush.bf16.msra.mxu0 0
        %477 = vmatpush.bf16.msra.mxu0 0
        %478 = vmatpush.bf16.msra.mxu0 0
        %479 = vmatpush.bf16.msra.mxu0 %v470
        %480 = vmatmul.bf16.gmra.mxu0 %v467
        %v481 = vpop.f32.mrf.mxu0
        %v482 = vadd.f32 0.0, %v481
        %v483 = vpop.f32.mrf.mxu0
        %484 = vdwg.mxu0
        %v486 = vunpack.c.l.b16 %v452
        %v487 = vpack.c.b16 %v486, %v486
        %488 = vrot.lane.b32.xlu0 %v487, 16
        %v489 = vpop.permute.xlu0 %488
        %v491 = vsel %vm188, %v451, 0
        %v494 = vsel %vm192, %v489, 0
        %496 = vmatpush.bf16.msra.mxu0 0
        %497 = vmatpush.bf16.msra.mxu0 0
        %498 = vmatpush.bf16.msra.mxu0 0
        %499 = vmatpush.bf16.msra.mxu0 0
        %500 = vmatpush.bf16.msra.mxu0 0
        %501 = vmatpush.bf16.msra.mxu0 0
        %502 = vmatpush.bf16.msra.mxu0 0
        %503 = vmatpush.bf16.msra.mxu0 %v494
        %504 = vmatmul.bf16.gmra.mxu0 %v491
        %v505 = vpop.f32.mrf.mxu0
        %v506 = vadd.f32 %v482, %v505
        %v507 = vpop.f32.mrf.mxu0
        %508 = vdwg.mxu0
        %s509 = scalar_lea.vmem %s1, 44
        %v510 = vld [vmem:[%s509] sm:$0xf]
        %v511 = vld [vmem:[#allocation3 + $0x4] sm:$0xf]
        %v513 = vsel %vm188, %v510, 0
        %v516 = vsel %vm192, %v511, 0
        %518 = vmatpush.bf16.msra.mxu0 0
        %519 = vmatpush.bf16.msra.mxu0 0
        %520 = vmatpush.bf16.msra.mxu0 0
        %521 = vmatpush.bf16.msra.mxu0 0
        %522 = vmatpush.bf16.msra.mxu0 0
        %523 = vmatpush.bf16.msra.mxu0 0
        %524 = vmatpush.bf16.msra.mxu0 0
        %525 = vmatpush.bf16.msra.mxu0 %v516
        %526 = vmatmul.bf16.gmra.mxu0 %v513
        %v527 = vpop.f32.mrf.mxu0
        %v528 = vadd.f32 0.0, %v527
        %v529 = vpop.f32.mrf.mxu0
        %530 = vdwg.mxu0
        %v531 = vadd.f32 %v506, %v528
        %s532 = scalar_lea.vmem %s2, 24
        %v533 = vld [vmem:[%s532] sm:$0xff]
        %535 = vset.pattern.permute.xlu0 0
        %536 = vperm.xlu0 %535, %v533
        %v537 = vpop.permute.xlu0 %536
        %v539 = vadd.f32 %v531, %v537
        %vm540 = vcmask 130048
        %541 = vst.msk [vmem:[%s161] sm:$0xff] %vm540, %v539
        %s542 = sand.u32 %s93, 1
        %s543 = scalar_lea.sflag [#allocation5], %s542
        %s544 = sand.u32 %s93, 1
        %s545 = smul.addr %s544, 8
        %s546 = scalar_lea.vmem [#allocation4], %s545
        // Predicated region
        $region33: #{tpu_custom_call.1} parent=31 // pred_check
          %p547 = pneg %p103
        $region34: #{tpu_custom_call.1} parent=31 // pred_check_branch
          %549 = sbr.rel (%p547) target = $region36
        $region35: #{tpu_custom_call.1} parent=31 // pred_region
          %551 = vsyncadd %s543, 0
          %s552 = smul.addr %s17, 8
          %s553 = scalar_lea.hbm %s3, %s552
          %s555 = sshll.u32 %s546, 4
          %s556 = int_to_ptr.vmem [resolvable:$true] %s555
          %s557 = sshll.u32 %s553, 4
          %s558 = int_to_ptr.hbm [resolvable:$true] %s557
          %560 = dma.vmem_to_hbm [thread:$0]  %s556, 128, %s558, %s543
        $region36: #{tpu_custom_call.1} parent=31 // pred_fallthru
          _
      $region32: #{tpu_custom_call.1} parent=5 // pred_fallthru
        _
      %p561 = scmp.le.s32.totalorder 2, %s12
      // Predicated region
      $region37: #{tpu_custom_call.1} parent=5 // pred_check
        %p562 = pneg %p561
      $region38: #{tpu_custom_call.1} parent=5 // pred_check_branch
        %564 = sbr.rel (%p562) target = $region40
      $region39: #{tpu_custom_call.1} parent=5 // pred_region
        %s565 = ssub.s32 %s12, 2
        // Predicated region
        $region41: #{tpu_custom_call.1} parent=39 // pred_check
          %p566 = pneg %p109
        $region42: #{tpu_custom_call.1} parent=39 // pred_check_branch
          %568 = sbr.rel (%p566) target = $region44
        $region43: #{tpu_custom_call.1} parent=39 // pred_region
          %s569 = sand.u32 %s94, 1
          %s570 = scalar_lea.sflag [#allocation5], %s569
          %s571 = sand.u32 %s94, 1
          %s572 = smul.addr %s571, 8
          %s573 = scalar_lea.vmem [#allocation4], %s572
          %575 = dma.done %s570, 128
        $region44: #{tpu_custom_call.1} parent=39 // pred_fallthru
          _
      $region40: #{tpu_custom_call.1} parent=5 // pred_fallthru
        _
    $region6: #{tpu_custom_call.1} parent=1 // loop_footer
      %s16 = sadd.s32 1, %s12
    $region7: #{tpu_custom_call.1} parent=1 // loop_footer_branch
      %11 = sbr.rel target = $region3
    $region8: #{tpu_custom_call.1} parent=1 // loop_exit
      _
    %576 = vsyncpa [#allocation5], 1
    %s577 = scalar_lea.sflag [#allocation5], 1
    %578 = vsyncpa %s577, 1

</llo_original>
